<compile_context>
chip_gen: v5e
topology: v5e:2x2
jax: 0.10.0
libtpu: 0.0.40
codegen_flags: <defaults>
</compile_context>

<pallas_src>
import functools

import jax
import jax.numpy as jnp
from jax import lax
from jax.experimental import pallas as pl
from jax.experimental.pallas import tpu as pltpu


def _patch_merge_kernel(x_ref, w_ref, b_ref, o_ref, *, eps, c2):
    # x_ref: (TR, 2, WH, 2C)  merged-input block; axis 1 = H sub-pixel,
    #        channel axis = [w-even | w-odd] fold -> even row = [x0|x2], odd = [x1|x3]
    # w_ref: (4C, OUT) gamma-folded reduction weight (rows permuted to kernel order)
    # b_ref: (1, OUT)  f32 post-matmul bias  (= beta @ W)
    # o_ref: (TR*WH, OUT)
    tr, _, wh, _ = x_ref.shape
    nrow = tr * wh

    xe = x_ref[:, 0, :, :].reshape(nrow, c2).astype(jnp.float32)   # [x0 | x2]
    xo = x_ref[:, 1, :, :].reshape(nrow, c2).astype(jnp.float32)   # [x1 | x3]

    # LayerNorm statistics over all 4C channels (f32, E[x^2]-E[x]^2 with clamp).
    inv_n = 1.0 / (2.0 * c2)
    s = (jnp.sum(xe, axis=-1, keepdims=True) +
         jnp.sum(xo, axis=-1, keepdims=True))
    ss = (jnp.sum(xe * xe, axis=-1, keepdims=True) +
          jnp.sum(xo * xo, axis=-1, keepdims=True))
    mean = s * inv_n
    var = jnp.maximum(ss * inv_n - mean * mean, 0.0)
    rstd = lax.rsqrt(var + eps)                      # (nrow, 1)

    # Centre only (gamma already folded into w_ref; rstd applied post-matmul).
    xce = xe - mean
    xco = xo - mean

    # Reduction: two partial MXU matmuls summed (f32 accumulation).  Operand
    # dtype follows the (folded) weight: bf16 on v6e/v7x halves DMA + fast MXU.
    # Split-K (K = 2C each) keeps the channel fold free; acceptable MXU padding.
    mxu_dtype = w_ref.dtype
    acc = jnp.dot(xce.astype(mxu_dtype), w_ref[:c2, :],
                  preferred_element_type=jnp.float32)
    acc = acc + jnp.dot(xco.astype(mxu_dtype), w_ref[c2:, :],
                        preferred_element_type=jnp.float32)

    out = acc * rstd + b_ref[...]                    # rstd on out_dim width only
    o_ref[...] = out.astype(o_ref.dtype)


def _pick_row_tile(n_r, wh, target_rows, max_block_rows):
    """Largest divisor `tr` of n_r whose (tr*wh)-row output block is 8-row aligned
    (or covers everything), fits the VMEM row budget, and is close to target_rows."""
    divisors = [d for d in range(1, n_r + 1) if n_r % d == 0]
    cands = [d for d in divisors if (d * wh) % 8 == 0 or d == n_r]
    fitting = [d for d in cands if d * wh <= max_block_rows]
    if not fitting:
        return min(cands)            # smallest legal tile (rare pathological shapes)
    below = [d for d in fitting if d * wh <= target_rows]
    return max(below) if below else min(fitting)


def _vmem_config():
    """(block-footprint budget, vmem_limit cap) — chip aware with headroom."""
    try:
        cap = int(pltpu.get_tpu_info().vmem_capacity_bytes)
    except Exception:
        cap = 64 * 1024 * 1024       # conservative fallback (v7x-sized)
    limit_cap = (cap * 3) // 4       # 48 MiB on v7x, 96 MiB on v5e/v6e
    budget = cap // 2                # footprint budget for row-tile picking
    return budget, limit_cap


def prepare_patch_merging_params(gamma, beta, weight_t, in_dim, mxu_dtype):
    """Fold LN gamma/beta into the matmul.  Hoist this out of the forward path
    (parameter-init time) or rely on constant folding under jit.

    weight_t: (4C, out) transpose of nn.Linear(4C, out, bias=False).weight.
    Returns (w_fold (4C, out) in mxu_dtype, bias (1, out) f32)."""
    C = in_dim
    # Torch concat order [x0|x1|x2|x3] -> kernel order [x0|x2|x1|x3].
    perm = jnp.concatenate([
        jnp.arange(0, C), jnp.arange(2 * C, 3 * C),
        jnp.arange(C, 2 * C), jnp.arange(3 * C, 4 * C)])
    w32 = weight_t.astype(jnp.float32)
    g32 = gamma.astype(jnp.float32)
    b32 = beta.astype(jnp.float32)
    w_fold = (g32[:, None] * w32)[perm, :].astype(mxu_dtype)   # fold in f32, then cast
    bias = (b32 @ w32).reshape(1, -1)                           # perm-invariant, f32
    return w_fold, bias


def patch_merging(x, gamma, beta, weight_t, *, eps=1e-5, target_block_rows=2048):
    """x: (B, H, W, C) channels-last. Returns (B, H//2, W//2, out_dim)."""
    B, H, W, C = x.shape
    assert H % 2 == 0 and W % 2 == 0
    Hh, Wh = H // 2, W // 2
    C2, C4 = 2 * C, 4 * C
    out_dim = weight_t.shape[1]
    assert weight_t.shape[0] == C4 and gamma.shape == (C4,) and beta.shape == (C4,)

    R = B * Hh                    # fused (batch, H/2) row axis
    n_rows = R * Wh               # total output pixels

    # Free, contiguous reshape: (B, H, W, C) -> (R, 2, Wh, 2C).
    xr = x.reshape(R, 2, Wh, C2)

    mxu_dtype = jnp.bfloat16 if x.dtype == jnp.bfloat16 else jnp.float32
    w_fold, bias = prepare_patch_merging_params(gamma, beta, weight_t, C, mxu_dtype)

    # VMEM budget -> row tile.
    in_item = x.dtype.itemsize
    out_item = x.dtype.itemsize
    w_item = 2 if mxu_dtype == jnp.bfloat16 else 4
    per_row = (2 * C4 * in_item            # input block, double buffered
               + 2 * out_dim * out_item    # output block, double buffered
               + 2 * C4 * 4                # f32 temps (xe/xo, centred reuse)
               + (C4 * 2 if mxu_dtype == jnp.bfloat16 else 0)  # bf16 cast copies
               + 2 * out_dim * 4)          # f32 accumulator (+ scaled copy)
    fixed = (2 * C4 * out_dim * w_item     # weight (double buffered by pipeline)
             + 2 * out_dim * 4             # bias
             + (1 << 16))                  # misc slack
    budget, limit_cap = _vmem_config()
    max_block_rows = max(8, (budget - fixed) // per_row)
    tr = _pick_row_tile(R, Wh, target_block_rows, max_block_rows)
    grid = (R // tr,)

    block_est = fixed + tr * Wh * per_row
    vmem_limit = int(min(limit_cap, max(32 * 1024 * 1024, 2 * block_est)))

    kernel = functools.partial(_patch_merge_kernel, eps=eps, c2=C2)

    # NOTE: for out_dim not a multiple of 128 the tail store is masked (vst.msk);
    # padding the weight columns would need a downstream slice, so keep native.
    out_flat = pl.pallas_call(
        kernel,
        out_shape=jax.ShapeDtypeStruct((n_rows, out_dim), x.dtype),
        grid_spec=pltpu.PrefetchScalarGridSpec(
            num_scalar_prefetch=0,
            grid=grid,
            in_specs=[
                pl.BlockSpec((tr, 2, Wh, C2), lambda i: (i, 0, 0, 0)),
                pl.BlockSpec((C4, out_dim), lambda i: (0, 0)),   # grid-invariant
                pl.BlockSpec((1, out_dim), lambda i: (0, 0)),    # grid-invariant
            ],
            out_specs=pl.BlockSpec((tr * Wh, out_dim), lambda i: (i, 0)),
        ),
        compiler_params=pltpu.CompilerParams(
            dimension_semantics=("parallel",),
            vmem_limit_bytes=vmem_limit,
        ),
    )(xr, w_fold, bias)

    return out_flat.reshape(B, Hh, Wh, out_dim)


def patch_merging_ref(x, gamma, beta, weight_t, eps=1e-5):
    """Pure-JAX reference (mirrors the PyTorch module exactly, f32 math)."""
    x0 = x[:, 0::2, 0::2, :]
    x1 = x[:, 1::2, 0::2, :]
    x2 = x[:, 0::2, 1::2, :]
    x3 = x[:, 1::2, 1::2, :]
    xm = jnp.concatenate([x0, x1, x2, x3], axis=-1).astype(jnp.float32)
    mean = jnp.mean(xm, axis=-1, keepdims=True)
    var = jnp.mean((xm - mean) ** 2, axis=-1, keepdims=True)
    xn = (xm - mean) / jnp.sqrt(var + eps)
    y = xn * gamma.astype(jnp.float32) + beta.astype(jnp.float32)
    return jnp.dot(y, weight_t.astype(jnp.float32))


if __name__ == "__main__":
    key = jax.random.PRNGKey(0)

    def make_case(sub, B, H, W, C, out_dim, dtype):
        k_x, k_w, k_g, k_b = jax.random.split(sub, 4)
        x = jax.random.normal(k_x, (B, H, W, C), dtype=jnp.float32)
        bound = 1.0 / (4 * C) ** 0.5
        weight_t = jax.random.uniform(k_w, (4 * C, out_dim), minval=-bound,
                                      maxval=bound, dtype=jnp.float32)
        gamma = 1.0 + 0.1 * jax.random.normal(k_g, (4 * C,), dtype=jnp.float32)
        beta = 0.1 * jax.random.normal(k_b, (4 * C,), dtype=jnp.float32)
        return x.astype(dtype), gamma, beta, weight_t

    cases = [
        # (B, H,  W,  C,  out_dim, dtype,        atol, rtol)
        (2, 16, 16, 4,  8,   jnp.float32,  1e-4, 1e-4),   # tiny, matches module spec
        (2, 16, 16, 64, 128, jnp.float32,  1e-4, 1e-4),   # lane-aligned 4C=256, out=128
        (2, 16, 16, 64, 128, jnp.bfloat16, 5e-2, 5e-2),   # bf16 activations / MXU path
    ]
    for idx, (B, H, W, C, out_dim, dtype, atol, rtol) in enumerate(cases):
        key, sub = jax.random.split(key)
        x, gamma, beta, weight_t = make_case(sub, B, H, W, C, out_dim, dtype)
        out = jax.block_until_ready(patch_merging(x, gamma, beta, weight_t))
        ref = patch_merging_ref(x, gamma, beta, weight_t)
        assert out.shape == (B, H // 2, W // 2, out_dim), (idx, out.shape)
        out32 = out.astype(jnp.float32)
        err = float(jnp.max(jnp.abs(out32 - ref)))
        assert jnp.allclose(out32, ref, atol=atol, rtol=rtol), (idx, err)

    print("KERNEL_OK")
</pallas_src>

<mosaic_0001>
module attributes {stable_mosaic.version = 11 : i64} {
  func.func @_patch_merge_kernel(%arg0: i32, %arg1: memref<16x2x8x8xf32, #tpu.memory_space<vmem>>, %arg2: memref<16x8xf32, #tpu.memory_space<vmem>>, %arg3: memref<1x8xf32, #tpu.memory_space<vmem>>, %arg4: memref<128x8xf32, #tpu.memory_space<vmem>>) attributes {dimension_semantics = [#tpu.dimension_semantics<parallel>], iteration_bounds = array<i64: 1>, scalar_prefetch = 0 : i64, scratch_operands = 0 : i64, tpu.core_type = #tpu.core_type<tc>, window_params = [{transform_indices = @transform_0, window_bounds = array<i64: 16, 2, 8, 8>}, {pipeline_mode = #tpu.pipeline_mode<synchronous>, transform_indices = @transform_1, window_bounds = array<i64: 16, 8>}, {pipeline_mode = #tpu.pipeline_mode<synchronous>, transform_indices = @transform_2, window_bounds = array<i64: 1, 8>}, {transform_indices = @transform_3, window_bounds = array<i64: 128, 8>}]} {
    %c0 = arith.constant 0 : index
    %c0_0 = arith.constant 0 : index
    %c0_1 = arith.constant 0 : index
    %c0_2 = arith.constant 0 : index
    %0 = vector.load %arg1[%c0, %c0_0, %c0_1, %c0_2] : memref<16x2x8x8xf32, #tpu.memory_space<vmem>>, vector<16x1x8x8xf32>
    %1 = vector.shape_cast %0 : vector<16x1x8x8xf32> to vector<16x8x8xf32>
    %2 = vector.shape_cast %1 : vector<16x8x8xf32> to vector<128x8xf32>
    %c0_3 = arith.constant 0 : index
    %c1 = arith.constant 1 : index
    %c0_4 = arith.constant 0 : index
    %c0_5 = arith.constant 0 : index
    %3 = vector.load %arg1[%c0_3, %c1, %c0_4, %c0_5] : memref<16x2x8x8xf32, #tpu.memory_space<vmem>>, vector<16x1x8x8xf32>
    %4 = vector.shape_cast %3 : vector<16x1x8x8xf32> to vector<16x8x8xf32>
    %5 = vector.shape_cast %4 : vector<16x8x8xf32> to vector<128x8xf32>
    %cst = arith.constant dense<0.000000e+00> : vector<128xf32>
    %6 = vector.multi_reduction <add>, %2, %cst [1] : vector<128x8xf32> to vector<128xf32>
    %7 = vector.shape_cast %6 : vector<128xf32> to vector<128x1xf32>
    %cst_6 = arith.constant dense<0.000000e+00> : vector<128xf32>
    %8 = vector.multi_reduction <add>, %5, %cst_6 [1] : vector<128x8xf32> to vector<128xf32>
    %9 = vector.shape_cast %8 : vector<128xf32> to vector<128x1xf32>
    %10 = arith.addf %7, %9 : vector<128x1xf32>
    %11 = arith.mulf %2, %2 : vector<128x8xf32>
    %cst_7 = arith.constant dense<0.000000e+00> : vector<128xf32>
    %12 = vector.multi_reduction <add>, %11, %cst_7 [1] : vector<128x8xf32> to vector<128xf32>
    %13 = vector.shape_cast %12 : vector<128xf32> to vector<128x1xf32>
    %14 = arith.mulf %5, %5 : vector<128x8xf32>
    %cst_8 = arith.constant dense<0.000000e+00> : vector<128xf32>
    %15 = vector.multi_reduction <add>, %14, %cst_8 [1] : vector<128x8xf32> to vector<128xf32>
    %16 = vector.shape_cast %15 : vector<128xf32> to vector<128x1xf32>
    %17 = arith.addf %13, %16 : vector<128x1xf32>
    %cst_9 = arith.constant 6.250000e-02 : f32
    %18 = vector.broadcast %cst_9 : f32 to vector<128x1xf32>
    %19 = arith.mulf %10, %18 : vector<128x1xf32>
    %cst_10 = arith.constant 6.250000e-02 : f32
    %20 = vector.broadcast %cst_10 : f32 to vector<128x1xf32>
    %21 = arith.mulf %17, %20 : vector<128x1xf32>
    %22 = arith.mulf %19, %19 : vector<128x1xf32>
    %23 = arith.subf %21, %22 : vector<128x1xf32>
    %cst_11 = arith.constant 0.000000e+00 : f32
    %24 = vector.broadcast %cst_11 : f32 to vector<128x1xf32>
    %25 = arith.maximumf %23, %24 : vector<128x1xf32>
    %cst_12 = arith.constant 9.99999974E-6 : f32
    %26 = vector.broadcast %cst_12 : f32 to vector<128x1xf32>
    %27 = arith.addf %25, %26 : vector<128x1xf32>
    %28 = math.rsqrt %27 : vector<128x1xf32>
    %29 = vector.broadcast %19 : vector<128x1xf32> to vector<128x8xf32>
    %30 = arith.subf %2, %29 : vector<128x8xf32>
    %31 = vector.broadcast %19 : vector<128x1xf32> to vector<128x8xf32>
    %32 = arith.subf %5, %31 : vector<128x8xf32>
    %c0_13 = arith.constant 0 : index
    %c0_14 = arith.constant 0 : index
    %33 = vector.load %arg2[%c0_13, %c0_14] : memref<16x8xf32, #tpu.memory_space<vmem>>, vector<8x8xf32>
    %cst_15 = arith.constant dense<0.000000e+00> : vector<128x8xf32>
    %34 = tpu.matmul %30, %33, %cst_15 {dimension_numbers = #tpu.dot_dimension_numbers<[1], [0], [0], [1], [0, 0, 1, 1], [], []>} : vector<128x8xf32>, vector<8x8xf32>, vector<128x8xf32> -> vector<128x8xf32>
    %c8 = arith.constant 8 : index
    %c0_16 = arith.constant 0 : index
    %35 = vector.load %arg2[%c8, %c0_16] : memref<16x8xf32, #tpu.memory_space<vmem>>, vector<8x8xf32>
    %cst_17 = arith.constant dense<0.000000e+00> : vector<128x8xf32>
    %36 = tpu.matmul %32, %35, %cst_17 {dimension_numbers = #tpu.dot_dimension_numbers<[1], [0], [0], [1], [0, 0, 1, 1], [], []>} : vector<128x8xf32>, vector<8x8xf32>, vector<128x8xf32> -> vector<128x8xf32>
    %37 = arith.addf %34, %36 : vector<128x8xf32>
    %38 = vector.broadcast %28 : vector<128x1xf32> to vector<128x8xf32>
    %39 = arith.mulf %37, %38 : vector<128x8xf32>
    %c0_18 = arith.constant 0 : index
    %c0_19 = arith.constant 0 : index
    %40 = vector.load %arg3[%c0_18, %c0_19] : memref<1x8xf32, #tpu.memory_space<vmem>>, vector<1x8xf32>
    %41 = vector.broadcast %40 : vector<1x8xf32> to vector<128x8xf32>
    %42 = arith.addf %39, %41 : vector<128x8xf32>
    %c0_20 = arith.constant 0 : index
    %c0_21 = arith.constant 0 : index
    %43 = vector.load %arg4[%c0_20, %c0_21] : memref<128x8xf32, #tpu.memory_space<vmem>>, vector<128x8xf32>
    tpu.vector_store %arg4[%c0_20, %c0_21], %42 {strides = array<i32>} : memref<128x8xf32, #tpu.memory_space<vmem>>, vector<128x8xf32>,
    return
  }
  func.func @transform_0(%arg0: i32) -> (i32, i32, i32, i32) {
    %c0_i32 = arith.constant 0 : i32
    %c0_i32_0 = arith.constant 0 : i32
    %c0_i32_1 = arith.constant 0 : i32
    %c0_i32_2 = arith.constant 0 : i32
    return %arg0, %c0_i32, %c0_i32_0, %c0_i32_1 : i32, i32, i32, i32
  }
  func.func @transform_1(%arg0: i32) -> (i32, i32) {
    %c0_i32 = arith.constant 0 : i32
    %c0_i32_0 = arith.constant 0 : i32
    %c0_i32_1 = arith.constant 0 : i32
    return %c0_i32, %c0_i32_0 : i32, i32
  }
  func.func @transform_2(%arg0: i32) -> (i32, i32) {
    %c0_i32 = arith.constant 0 : i32
    %c0_i32_0 = arith.constant 0 : i32
    %c0_i32_1 = arith.constant 0 : i32
    return %c0_i32, %c0_i32_0 : i32, i32
  }
  func.func @transform_3(%arg0: i32) -> (i32, i32) {
    %c0_i32 = arith.constant 0 : i32
    %c0_i32_0 = arith.constant 0 : i32
    return %arg0, %c0_i32 : i32, i32
  }
}

</mosaic_0001>

<llo_original>
// kernel: tpu_custom_call.1
$region0: #{tpu_custom_call.1}
  #allocation0 [shape = 'u32[]', space=smem, size = 0x4, offset = 0x4, fixed_abs, tag = 'smem constant byte address 0x4 - core index']
  #allocation1 [shape = 'u32[72,128]{1,0:T(1,128)}', space=vmem, size = 0x9000, scoped, tag = 'internal scratch']
  %s0 = inlined_call_operand.vmem [shape: f32[16,2,8,8], index: 0, kind: input, shape index: {}]
  %s1 = inlined_call_operand.vmem [shape: f32[16,8], index: 1, kind: input, shape index: {}]
  %s2 = inlined_call_operand.vmem [shape: f32[1,8], index: 2, kind: input, shape index: {}]
  %s3 = inlined_call_operand.vmem [shape: f32[128,8], index: 3, kind: output, shape index: {}]
  %s4 = sld [smem:[#allocation0]]
  $region22: #{tpu_custom_call.1} parent=0
    _
  %s6 = ssub.s32 1, %s4
  %s7 = scalar_select 0, %s6, %s4
  // Predicated region
  $region2: #{tpu_custom_call.1} parent=0 // pred_check
    _
  $region3: #{tpu_custom_call.1} parent=0 // pred_check_branch
    %9 = sbr.rel (0) target = $region5
  $region4: #{tpu_custom_call.1} parent=0 // pred_region
    _
  $region5: #{tpu_custom_call.1} parent=0 // pred_fallthru
    _
  // Predicated region
  $region6: #{tpu_custom_call.1} parent=0 // pred_check
    _
  $region7: #{tpu_custom_call.1} parent=0 // pred_check_branch
    %11 = sbr.rel (0) target = $region9
  $region8: #{tpu_custom_call.1} parent=0 // pred_region
    _
  $region9: #{tpu_custom_call.1} parent=0 // pred_fallthru
    _
  // Predicated region
  $region10: #{tpu_custom_call.1} parent=0 // pred_check
    _
  $region11: #{tpu_custom_call.1} parent=0 // pred_check_branch
    %13 = sbr.rel (0) target = $region13
  $region12: #{tpu_custom_call.1} parent=0 // pred_region
    _
  $region13: #{tpu_custom_call.1} parent=0 // pred_fallthru
    _
  %v14 = vld [vmem:[%s0] sm:$0xff]
  %v15 = vld [vmem:[%s0 + $0x10] sm:$0xff]
  %v16 = vld [vmem:[%s0 + $0x20] sm:$0xff]
  %v17 = vld [vmem:[%s0 + $0x30] sm:$0xff]
  %v18 = vld [vmem:[%s0 + $0x40] sm:$0xff]
  %v19 = vld [vmem:[%s0 + $0x50] sm:$0xff]
  %v20 = vld [vmem:[%s0 + $0x60] sm:$0xff]
  %v21 = vld [vmem:[%s0 + $0x70] sm:$0xff]
  %v22 = vld [vmem:[%s0 + $0x80] sm:$0xff]
  %v23 = vld [vmem:[%s0 + $0x90] sm:$0xff]
  %v24 = vld [vmem:[%s0 + $0xa0] sm:$0xff]
  %v25 = vld [vmem:[%s0 + $0xb0] sm:$0xff]
  %v26 = vld [vmem:[%s0 + $0xc0] sm:$0xff]
  %v27 = vld [vmem:[%s0 + $0xd0] sm:$0xff]
  %v28 = vld [vmem:[%s0 + $0xe0] sm:$0xff]
  %v29 = vld [vmem:[%s0 + $0xf0] sm:$0xff]
  %s30 = scalar_lea.vmem %s0, 8
  %v31 = vld [vmem:[%s30] sm:$0xff]
  %v32 = vld [vmem:[%s30 + $0x10] sm:$0xff]
  %v33 = vld [vmem:[%s30 + $0x20] sm:$0xff]
  %v34 = vld [vmem:[%s30 + $0x30] sm:$0xff]
  %v35 = vld [vmem:[%s30 + $0x40] sm:$0xff]
  %v36 = vld [vmem:[%s30 + $0x50] sm:$0xff]
  %v37 = vld [vmem:[%s30 + $0x60] sm:$0xff]
  %v38 = vld [vmem:[%s30 + $0x70] sm:$0xff]
  %v39 = vld [vmem:[%s30 + $0x80] sm:$0xff]
  %v40 = vld [vmem:[%s30 + $0x90] sm:$0xff]
  %v41 = vld [vmem:[%s30 + $0xa0] sm:$0xff]
  %v42 = vld [vmem:[%s30 + $0xb0] sm:$0xff]
  %v43 = vld [vmem:[%s30 + $0xc0] sm:$0xff]
  %v44 = vld [vmem:[%s30 + $0xd0] sm:$0xff]
  %v45 = vld [vmem:[%s30 + $0xe0] sm:$0xff]
  %v46 = vld [vmem:[%s30 + $0xf0] sm:$0xff]
  %vm47 = vcmask 64512
  %v48 = vsel %vm47, %v14, 0.0
  %49 = vadd.xlane.f32.xlu0 %v48
  %v50 = vpop.xlane.xlu0 %49
  %v51 = vsel %vm47, %v15, 0.0
  %52 = vadd.xlane.f32.xlu0 %v51
  %v53 = vpop.xlane.xlu0 %52
  %v54 = vsel %vm47, %v16, 0.0
  %55 = vadd.xlane.f32.xlu0 %v54
  %v56 = vpop.xlane.xlu0 %55
  %v57 = vsel %vm47, %v17, 0.0
  %58 = vadd.xlane.f32.xlu0 %v57
  %v59 = vpop.xlane.xlu0 %58
  %v60 = vsel %vm47, %v18, 0.0
  %61 = vadd.xlane.f32.xlu0 %v60
  %v62 = vpop.xlane.xlu0 %61
  %v63 = vsel %vm47, %v19, 0.0
  %64 = vadd.xlane.f32.xlu0 %v63
  %v65 = vpop.xlane.xlu0 %64
  %v66 = vsel %vm47, %v20, 0.0
  %67 = vadd.xlane.f32.xlu0 %v66
  %v68 = vpop.xlane.xlu0 %67
  %v69 = vsel %vm47, %v21, 0.0
  %70 = vadd.xlane.f32.xlu0 %v69
  %v71 = vpop.xlane.xlu0 %70
  %v72 = vsel %vm47, %v22, 0.0
  %73 = vadd.xlane.f32.xlu0 %v72
  %v74 = vpop.xlane.xlu0 %73
  %v75 = vsel %vm47, %v23, 0.0
  %76 = vadd.xlane.f32.xlu0 %v75
  %v77 = vpop.xlane.xlu0 %76
  %v78 = vsel %vm47, %v24, 0.0
  %79 = vadd.xlane.f32.xlu0 %v78
  %v80 = vpop.xlane.xlu0 %79
  %v81 = vsel %vm47, %v25, 0.0
  %82 = vadd.xlane.f32.xlu0 %v81
  %v83 = vpop.xlane.xlu0 %82
  %v84 = vsel %vm47, %v26, 0.0
  %85 = vadd.xlane.f32.xlu0 %v84
  %v86 = vpop.xlane.xlu0 %85
  %v87 = vsel %vm47, %v27, 0.0
  %88 = vadd.xlane.f32.xlu0 %v87
  %v89 = vpop.xlane.xlu0 %88
  %v90 = vsel %vm47, %v28, 0.0
  %91 = vadd.xlane.f32.xlu0 %v90
  %v92 = vpop.xlane.xlu0 %91
  %v93 = vsel %vm47, %v29, 0.0
  %94 = vadd.xlane.f32.xlu0 %v93
  %v95 = vpop.xlane.xlu0 %94
  %v96 = vsel %vm47, %v31, 0.0
  %97 = vadd.xlane.f32.xlu0 %v96
  %v98 = vpop.xlane.xlu0 %97
  %v99 = vsel %vm47, %v32, 0.0
  %100 = vadd.xlane.f32.xlu0 %v99
  %v101 = vpop.xlane.xlu0 %100
  %v102 = vsel %vm47, %v33, 0.0
  %103 = vadd.xlane.f32.xlu0 %v102
  %v104 = vpop.xlane.xlu0 %103
  %v105 = vsel %vm47, %v34, 0.0
  %106 = vadd.xlane.f32.xlu0 %v105
  %v107 = vpop.xlane.xlu0 %106
  %v108 = vsel %vm47, %v35, 0.0
  %109 = vadd.xlane.f32.xlu0 %v108
  %v110 = vpop.xlane.xlu0 %109
  %v111 = vsel %vm47, %v36, 0.0
  %112 = vadd.xlane.f32.xlu0 %v111
  %v113 = vpop.xlane.xlu0 %112
  %v114 = vsel %vm47, %v37, 0.0
  %115 = vadd.xlane.f32.xlu0 %v114
  %v116 = vpop.xlane.xlu0 %115
  %v117 = vsel %vm47, %v38, 0.0
  %118 = vadd.xlane.f32.xlu0 %v117
  %v119 = vpop.xlane.xlu0 %118
  %v120 = vsel %vm47, %v39, 0.0
  %121 = vadd.xlane.f32.xlu0 %v120
  %v122 = vpop.xlane.xlu0 %121
  %v123 = vsel %vm47, %v40, 0.0
  %124 = vadd.xlane.f32.xlu0 %v123
  %v125 = vpop.xlane.xlu0 %124
  %v126 = vsel %vm47, %v41, 0.0
  %127 = vadd.xlane.f32.xlu0 %v126
  %v128 = vpop.xlane.xlu0 %127
  %v129 = vsel %vm47, %v42, 0.0
  %130 = vadd.xlane.f32.xlu0 %v129
  %v131 = vpop.xlane.xlu0 %130
  %v132 = vsel %vm47, %v43, 0.0
  %133 = vadd.xlane.f32.xlu0 %v132
  %v134 = vpop.xlane.xlu0 %133
  %v135 = vsel %vm47, %v44, 0.0
  %136 = vadd.xlane.f32.xlu0 %v135
  %v137 = vpop.xlane.xlu0 %136
  %v138 = vsel %vm47, %v45, 0.0
  %139 = vadd.xlane.f32.xlu0 %v138
  %v140 = vpop.xlane.xlu0 %139
  %v141 = vsel %vm47, %v46, 0.0
  %142 = vadd.xlane.f32.xlu0 %v141
  %v143 = vpop.xlane.xlu0 %142
  %v144 = vadd.f32 %v50, %v98
  %v145 = vadd.f32 %v53, %v101
  %v146 = vadd.f32 %v56, %v104
  %v147 = vadd.f32 %v59, %v107
  %v148 = vadd.f32 %v62, %v110
  %v149 = vadd.f32 %v65, %v113
  %v150 = vadd.f32 %v68, %v116
  %v151 = vadd.f32 %v71, %v119
  %v152 = vadd.f32 %v74, %v122
  %v153 = vadd.f32 %v77, %v125
  %v154 = vadd.f32 %v80, %v128
  %v155 = vadd.f32 %v83, %v131
  %v156 = vadd.f32 %v86, %v134
  %v157 = vadd.f32 %v89, %v137
  %v158 = vadd.f32 %v92, %v140
  %v159 = vadd.f32 %v95, %v143
  %v160 = vmul.f32 %v14, %v14
  %v161 = vmul.f32 %v15, %v15
  %v162 = vmul.f32 %v16, %v16
  %v163 = vmul.f32 %v17, %v17
  %v164 = vmul.f32 %v18, %v18
  %v165 = vmul.f32 %v19, %v19
  %v166 = vmul.f32 %v20, %v20
  %v167 = vmul.f32 %v21, %v21
  %v168 = vmul.f32 %v22, %v22
  %v169 = vmul.f32 %v23, %v23
  %v170 = vmul.f32 %v24, %v24
  %v171 = vmul.f32 %v25, %v25
  %v172 = vmul.f32 %v26, %v26
  %v173 = vmul.f32 %v27, %v27
  %v174 = vmul.f32 %v28, %v28
  %v175 = vmul.f32 %v29, %v29
  %v176 = vsel %vm47, %v160, 0.0
  %177 = vadd.xlane.f32.xlu0 %v176
  %v178 = vpop.xlane.xlu0 %177
  %v179 = vsel %vm47, %v161, 0.0
  %180 = vadd.xlane.f32.xlu0 %v179
  %v181 = vpop.xlane.xlu0 %180
  %v182 = vsel %vm47, %v162, 0.0
  %183 = vadd.xlane.f32.xlu0 %v182
  %v184 = vpop.xlane.xlu0 %183
  %v185 = vsel %vm47, %v163, 0.0
  %186 = vadd.xlane.f32.xlu0 %v185
  %v187 = vpop.xlane.xlu0 %186
  %v188 = vsel %vm47, %v164, 0.0
  %189 = vadd.xlane.f32.xlu0 %v188
  %v190 = vpop.xlane.xlu0 %189
  %v191 = vsel %vm47, %v165, 0.0
  %192 = vadd.xlane.f32.xlu0 %v191
  %v193 = vpop.xlane.xlu0 %192
  %v194 = vsel %vm47, %v166, 0.0
  %195 = vadd.xlane.f32.xlu0 %v194
  %v196 = vpop.xlane.xlu0 %195
  %v197 = vsel %vm47, %v167, 0.0
  %198 = vadd.xlane.f32.xlu0 %v197
  %v199 = vpop.xlane.xlu0 %198
  %v200 = vsel %vm47, %v168, 0.0
  %201 = vadd.xlane.f32.xlu0 %v200
  %v202 = vpop.xlane.xlu0 %201
  %v203 = vsel %vm47, %v169, 0.0
  %204 = vadd.xlane.f32.xlu0 %v203
  %v205 = vpop.xlane.xlu0 %204
  %v206 = vsel %vm47, %v170, 0.0
  %207 = vadd.xlane.f32.xlu0 %v206
  %v208 = vpop.xlane.xlu0 %207
  %v209 = vsel %vm47, %v171, 0.0
  %210 = vadd.xlane.f32.xlu0 %v209
  %v211 = vpop.xlane.xlu0 %210
  %v212 = vsel %vm47, %v172, 0.0
  %213 = vadd.xlane.f32.xlu0 %v212
  %v214 = vpop.xlane.xlu0 %213
  %v215 = vsel %vm47, %v173, 0.0
  %216 = vadd.xlane.f32.xlu0 %v215
  %v217 = vpop.xlane.xlu0 %216
  %v218 = vsel %vm47, %v174, 0.0
  %219 = vadd.xlane.f32.xlu0 %v218
  %v220 = vpop.xlane.xlu0 %219
  %v221 = vsel %vm47, %v175, 0.0
  %222 = vadd.xlane.f32.xlu0 %v221
  %v223 = vpop.xlane.xlu0 %222
  %v224 = vmul.f32 %v31, %v31
  %v225 = vmul.f32 %v32, %v32
  %v226 = vmul.f32 %v33, %v33
  %v227 = vmul.f32 %v34, %v34
  %v228 = vmul.f32 %v35, %v35
  %v229 = vmul.f32 %v36, %v36
  %v230 = vmul.f32 %v37, %v37
  %v231 = vmul.f32 %v38, %v38
  %v232 = vmul.f32 %v39, %v39
  %v233 = vmul.f32 %v40, %v40
  %v234 = vmul.f32 %v41, %v41
  %v235 = vmul.f32 %v42, %v42
  %v236 = vmul.f32 %v43, %v43
  %v237 = vmul.f32 %v44, %v44
  %v238 = vmul.f32 %v45, %v45
  %v239 = vmul.f32 %v46, %v46
  %v240 = vsel %vm47, %v224, 0.0
  %241 = vadd.xlane.f32.xlu0 %v240
  %v242 = vpop.xlane.xlu0 %241
  %v243 = vsel %vm47, %v225, 0.0
  %244 = vadd.xlane.f32.xlu0 %v243
  %v245 = vpop.xlane.xlu0 %244
  %v246 = vsel %vm47, %v226, 0.0
  %247 = vadd.xlane.f32.xlu0 %v246
  %v248 = vpop.xlane.xlu0 %247
  %v249 = vsel %vm47, %v227, 0.0
  %250 = vadd.xlane.f32.xlu0 %v249
  %v251 = vpop.xlane.xlu0 %250
  %v252 = vsel %vm47, %v228, 0.0
  %253 = vadd.xlane.f32.xlu0 %v252
  %v254 = vpop.xlane.xlu0 %253
  %v255 = vsel %vm47, %v229, 0.0
  %256 = vadd.xlane.f32.xlu0 %v255
  %v257 = vpop.xlane.xlu0 %256
  %v258 = vsel %vm47, %v230, 0.0
  %259 = vadd.xlane.f32.xlu0 %v258
  %v260 = vpop.xlane.xlu0 %259
  %v261 = vsel %vm47, %v231, 0.0
  %262 = vadd.xlane.f32.xlu0 %v261
  %v263 = vpop.xlane.xlu0 %262
  %v264 = vsel %vm47, %v232, 0.0
  %265 = vadd.xlane.f32.xlu0 %v264
  %v266 = vpop.xlane.xlu0 %265
  %v267 = vsel %vm47, %v233, 0.0
  %268 = vadd.xlane.f32.xlu0 %v267
  %v269 = vpop.xlane.xlu0 %268
  %v270 = vsel %vm47, %v234, 0.0
  %271 = vadd.xlane.f32.xlu0 %v270
  %v272 = vpop.xlane.xlu0 %271
  %v273 = vsel %vm47, %v235, 0.0
  %274 = vadd.xlane.f32.xlu0 %v273
  %v275 = vpop.xlane.xlu0 %274
  %v276 = vsel %vm47, %v236, 0.0
  %277 = vadd.xlane.f32.xlu0 %v276
  %v278 = vpop.xlane.xlu0 %277
  %v279 = vsel %vm47, %v237, 0.0
  %280 = vadd.xlane.f32.xlu0 %v279
  %v281 = vpop.xlane.xlu0 %280
  %v282 = vsel %vm47, %v238, 0.0
  %283 = vadd.xlane.f32.xlu0 %v282
  %v284 = vpop.xlane.xlu0 %283
  %v285 = vsel %vm47, %v239, 0.0
  %286 = vadd.xlane.f32.xlu0 %v285
  %v287 = vpop.xlane.xlu0 %286
  %v288 = vadd.f32 %v178, %v242
  %v289 = vadd.f32 %v181, %v245
  %v290 = vadd.f32 %v184, %v248
  %v291 = vadd.f32 %v187, %v251
  %v292 = vadd.f32 %v190, %v254
  %v293 = vadd.f32 %v193, %v257
  %v294 = vadd.f32 %v196, %v260
  %v295 = vadd.f32 %v199, %v263
  %v296 = vadd.f32 %v202, %v266
  %v297 = vadd.f32 %v205, %v269
  %v298 = vadd.f32 %v208, %v272
  %v299 = vadd.f32 %v211, %v275
  %v300 = vadd.f32 %v214, %v278
  %v301 = vadd.f32 %v217, %v281
  %v302 = vadd.f32 %v220, %v284
  %v303 = vadd.f32 %v223, %v287
  %v304 = vmul.f32 %v144, 0.0625
  %v305 = vmul.f32 %v145, 0.0625
  %v306 = vmul.f32 %v146, 0.0625
  %v307 = vmul.f32 %v147, 0.0625
  %v308 = vmul.f32 %v148, 0.0625
  %v309 = vmul.f32 %v149, 0.0625
  %v310 = vmul.f32 %v150, 0.0625
  %v311 = vmul.f32 %v151, 0.0625
  %v312 = vmul.f32 %v152, 0.0625
  %v313 = vmul.f32 %v153, 0.0625
  %v314 = vmul.f32 %v154, 0.0625
  %v315 = vmul.f32 %v155, 0.0625
  %v316 = vmul.f32 %v156, 0.0625
  %v317 = vmul.f32 %v157, 0.0625
  %v318 = vmul.f32 %v158, 0.0625
  %v319 = vmul.f32 %v159, 0.0625
  %v320 = vmul.f32 %v288, 0.0625
  %v321 = vmul.f32 %v289, 0.0625
  %v322 = vmul.f32 %v290, 0.0625
  %v323 = vmul.f32 %v291, 0.0625
  %v324 = vmul.f32 %v292, 0.0625
  %v325 = vmul.f32 %v293, 0.0625
  %v326 = vmul.f32 %v294, 0.0625
  %v327 = vmul.f32 %v295, 0.0625
  %v328 = vmul.f32 %v296, 0.0625
  %v329 = vmul.f32 %v297, 0.0625
  %v330 = vmul.f32 %v298, 0.0625
  %v331 = vmul.f32 %v299, 0.0625
  %v332 = vmul.f32 %v300, 0.0625
  %v333 = vmul.f32 %v301, 0.0625
  %v334 = vmul.f32 %v302, 0.0625
  %v335 = vmul.f32 %v303, 0.0625
  %v336 = vmul.f32 %v304, %v304
  %v337 = vmul.f32 %v305, %v305
  %v338 = vmul.f32 %v306, %v306
  %v339 = vmul.f32 %v307, %v307
  %v340 = vmul.f32 %v308, %v308
  %v341 = vmul.f32 %v309, %v309
  %v342 = vmul.f32 %v310, %v310
  %v343 = vmul.f32 %v311, %v311
  %v344 = vmul.f32 %v312, %v312
  %v345 = vmul.f32 %v313, %v313
  %v346 = vmul.f32 %v314, %v314
  %v347 = vmul.f32 %v315, %v315
  %v348 = vmul.f32 %v316, %v316
  %v349 = vmul.f32 %v317, %v317
  %v350 = vmul.f32 %v318, %v318
  %v351 = vmul.f32 %v319, %v319
  %v352 = vsub.f32 %v320, %v336
  %v353 = vsub.f32 %v321, %v337
  %v354 = vsub.f32 %v322, %v338
  %v355 = vsub.f32 %v323, %v339
  %v356 = vsub.f32 %v324, %v340
  %v357 = vsub.f32 %v325, %v341
  %v358 = vsub.f32 %v326, %v342
  %v359 = vsub.f32 %v327, %v343
  %v360 = vsub.f32 %v328, %v344
  %v361 = vsub.f32 %v329, %v345
  %v362 = vsub.f32 %v330, %v346
  %v363 = vsub.f32 %v331, %v347
  %v364 = vsub.f32 %v332, %v348
  %v365 = vsub.f32 %v333, %v349
  %v366 = vsub.f32 %v334, %v350
  %v367 = vsub.f32 %v335, %v351
  %v368 = vmax.f32 %v352, 0.0
  %v369 = vmax.f32 %v353, 0.0
  %v370 = vmax.f32 %v354, 0.0
  %v371 = vmax.f32 %v355, 0.0
  %v372 = vmax.f32 %v356, 0.0
  %v373 = vmax.f32 %v357, 0.0
  %v374 = vmax.f32 %v358, 0.0
  %v375 = vmax.f32 %v359, 0.0
  %v376 = vmax.f32 %v360, 0.0
  %v377 = vmax.f32 %v361, 0.0
  %v378 = vmax.f32 %v362, 0.0
  %v379 = vmax.f32 %v363, 0.0
  %v380 = vmax.f32 %v364, 0.0
  %v381 = vmax.f32 %v365, 0.0
  %v382 = vmax.f32 %v366, 0.0
  %v383 = vmax.f32 %v367, 0.0
  %v384 = vadd.f32 %v368, 1e-05
  %v385 = vadd.f32 %v369, 1e-05
  %v386 = vadd.f32 %v370, 1e-05
  %v387 = vadd.f32 %v371, 1e-05
  %v388 = vadd.f32 %v372, 1e-05
  %v389 = vadd.f32 %v373, 1e-05
  %v390 = vadd.f32 %v374, 1e-05
  %v391 = vadd.f32 %v375, 1e-05
  %v392 = vadd.f32 %v376, 1e-05
  %v393 = vadd.f32 %v377, 1e-05
  %v394 = vadd.f32 %v378, 1e-05
  %v395 = vadd.f32 %v379, 1e-05
  %v396 = vadd.f32 %v380, 1e-05
  %v397 = vadd.f32 %v381, 1e-05
  %v398 = vadd.f32 %v382, 1e-05
  %v399 = vadd.f32 %v383, 1e-05
  %v400 = vrsqrt.pop %v384
  %v401 = vmul.f32 %v400, %v384
  %v402 = vmul.f32 %v401, %v400
  %v403 = vmul.f32 0.5, %v402
  %v404 = vsub.f32 1.5, %v403
  %v405 = vmul.f32 %v400, %v404
  %vm406 = vweird.f32 %v384
  %vm407 = vweird.f32 %v400
  %vm408 = vmor %vm406, %vm407
  %v409 = vsel %vm408, %v400, %v405
  %v410 = vrsqrt.pop %v385
  %v411 = vmul.f32 %v410, %v385
  %v412 = vmul.f32 %v411, %v410
  %v413 = vmul.f32 0.5, %v412
  %v414 = vsub.f32 1.5, %v413
  %v415 = vmul.f32 %v410, %v414
  %vm416 = vweird.f32 %v385
  %vm417 = vweird.f32 %v410
  %vm418 = vmor %vm416, %vm417
  %v419 = vsel %vm418, %v410, %v415
  %v420 = vrsqrt.pop %v386
  %v421 = vmul.f32 %v420, %v386
  %v422 = vmul.f32 %v421, %v420
  %v423 = vmul.f32 0.5, %v422
  %v424 = vsub.f32 1.5, %v423
  %v425 = vmul.f32 %v420, %v424
  %vm426 = vweird.f32 %v386
  %vm427 = vweird.f32 %v420
  %vm428 = vmor %vm426, %vm427
  %v429 = vsel %vm428, %v420, %v425
  %v430 = vrsqrt.pop %v387
  %v431 = vmul.f32 %v430, %v387
  %v432 = vmul.f32 %v431, %v430
  %v433 = vmul.f32 0.5, %v432
  %v434 = vsub.f32 1.5, %v433
  %v435 = vmul.f32 %v430, %v434
  %vm436 = vweird.f32 %v387
  %vm437 = vweird.f32 %v430
  %vm438 = vmor %vm436, %vm437
  %v439 = vsel %vm438, %v430, %v435
  %v440 = vrsqrt.pop %v388
  %v441 = vmul.f32 %v440, %v388
  %v442 = vmul.f32 %v441, %v440
  %v443 = vmul.f32 0.5, %v442
  %v444 = vsub.f32 1.5, %v443
  %v445 = vmul.f32 %v440, %v444
  %vm446 = vweird.f32 %v388
  %vm447 = vweird.f32 %v440
  %vm448 = vmor %vm446, %vm447
  %v449 = vsel %vm448, %v440, %v445
  %v450 = vrsqrt.pop %v389
  %v451 = vmul.f32 %v450, %v389
  %v452 = vmul.f32 %v451, %v450
  %v453 = vmul.f32 0.5, %v452
  %v454 = vsub.f32 1.5, %v453
  %v455 = vmul.f32 %v450, %v454
  %vm456 = vweird.f32 %v389
  %vm457 = vweird.f32 %v450
  %vm458 = vmor %vm456, %vm457
  %v459 = vsel %vm458, %v450, %v455
  %v460 = vrsqrt.pop %v390
  %v461 = vmul.f32 %v460, %v390
  %v462 = vmul.f32 %v461, %v460
  %v463 = vmul.f32 0.5, %v462
  %v464 = vsub.f32 1.5, %v463
  %v465 = vmul.f32 %v460, %v464
  %vm466 = vweird.f32 %v390
  %vm467 = vweird.f32 %v460
  %vm468 = vmor %vm466, %vm467
  %v469 = vsel %vm468, %v460, %v465
  %v470 = vrsqrt.pop %v391
  %v471 = vmul.f32 %v470, %v391
  %v472 = vmul.f32 %v471, %v470
  %v473 = vmul.f32 0.5, %v472
  %v474 = vsub.f32 1.5, %v473
  %v475 = vmul.f32 %v470, %v474
  %vm476 = vweird.f32 %v391
  %vm477 = vweird.f32 %v470
  %vm478 = vmor %vm476, %vm477
  %v479 = vsel %vm478, %v470, %v475
  %v480 = vrsqrt.pop %v392
  %v481 = vmul.f32 %v480, %v392
  %v482 = vmul.f32 %v481, %v480
  %v483 = vmul.f32 0.5, %v482
  %v484 = vsub.f32 1.5, %v483
  %v485 = vmul.f32 %v480, %v484
  %vm486 = vweird.f32 %v392
  %vm487 = vweird.f32 %v480
  %vm488 = vmor %vm486, %vm487
  %v489 = vsel %vm488, %v480, %v485
  %v490 = vrsqrt.pop %v393
  %v491 = vmul.f32 %v490, %v393
  %v492 = vmul.f32 %v491, %v490
  %v493 = vmul.f32 0.5, %v492
  %v494 = vsub.f32 1.5, %v493
  %v495 = vmul.f32 %v490, %v494
  %vm496 = vweird.f32 %v393
  %vm497 = vweird.f32 %v490
  %vm498 = vmor %vm496, %vm497
  %v499 = vsel %vm498, %v490, %v495
  %v500 = vrsqrt.pop %v394
  %v501 = vmul.f32 %v500, %v394
  %v502 = vmul.f32 %v501, %v500
  %v503 = vmul.f32 0.5, %v502
  %v504 = vsub.f32 1.5, %v503
  %v505 = vmul.f32 %v500, %v504
  %vm506 = vweird.f32 %v394
  %vm507 = vweird.f32 %v500
  %vm508 = vmor %vm506, %vm507
  %v509 = vsel %vm508, %v500, %v505
  %v510 = vrsqrt.pop %v395
  %v511 = vmul.f32 %v510, %v395
  %v512 = vmul.f32 %v511, %v510
  %v513 = vmul.f32 0.5, %v512
  %v514 = vsub.f32 1.5, %v513
  %v515 = vmul.f32 %v510, %v514
  %vm516 = vweird.f32 %v395
  %vm517 = vweird.f32 %v510
  %vm518 = vmor %vm516, %vm517
  %v519 = vsel %vm518, %v510, %v515
  %v520 = vrsqrt.pop %v396
  %v521 = vmul.f32 %v520, %v396
  %v522 = vmul.f32 %v521, %v520
  %v523 = vmul.f32 0.5, %v522
  %v524 = vsub.f32 1.5, %v523
  %v525 = vmul.f32 %v520, %v524
  %vm526 = vweird.f32 %v396
  %vm527 = vweird.f32 %v520
  %vm528 = vmor %vm526, %vm527
  %v529 = vsel %vm528, %v520, %v525
  %v530 = vrsqrt.pop %v397
  %v531 = vmul.f32 %v530, %v397
  %v532 = vmul.f32 %v531, %v530
  %v533 = vmul.f32 0.5, %v532
  %v534 = vsub.f32 1.5, %v533
  %v535 = vmul.f32 %v530, %v534
  %vm536 = vweird.f32 %v397
  %vm537 = vweird.f32 %v530
  %vm538 = vmor %vm536, %vm537
  %v539 = vsel %vm538, %v530, %v535
  %v540 = vrsqrt.pop %v398
  %v541 = vmul.f32 %v540, %v398
  %v542 = vmul.f32 %v541, %v540
  %v543 = vmul.f32 0.5, %v542
  %v544 = vsub.f32 1.5, %v543
  %v545 = vmul.f32 %v540, %v544
  %vm546 = vweird.f32 %v398
  %vm547 = vweird.f32 %v540
  %vm548 = vmor %vm546, %vm547
  %v549 = vsel %vm548, %v540, %v545
  %v550 = vrsqrt.pop %v399
  %v551 = vmul.f32 %v550, %v399
  %v552 = vmul.f32 %v551, %v550
  %v553 = vmul.f32 0.5, %v552
  %v554 = vsub.f32 1.5, %v553
  %v555 = vmul.f32 %v550, %v554
  %vm556 = vweird.f32 %v399
  %vm557 = vweird.f32 %v550
  %vm558 = vmor %vm556, %vm557
  %v559 = vsel %vm558, %v550, %v555
  %v560 = vsub.f32 %v14, %v304
  %v561 = vsub.f32 %v15, %v305
  %v562 = vsub.f32 %v16, %v306
  %v563 = vsub.f32 %v17, %v307
  %v564 = vsub.f32 %v18, %v308
  %v565 = vsub.f32 %v19, %v309
  %v566 = vsub.f32 %v20, %v310
  %v567 = vsub.f32 %v21, %v311
  %v568 = vsub.f32 %v22, %v312
  %v569 = vsub.f32 %v23, %v313
  %v570 = vsub.f32 %v24, %v314
  %v571 = vsub.f32 %v25, %v315
  %v572 = vsub.f32 %v26, %v316
  %v573 = vsub.f32 %v27, %v317
  %v574 = vsub.f32 %v28, %v318
  %v575 = vsub.f32 %v29, %v319
  %v576 = vsub.f32 %v31, %v304
  %v577 = vsub.f32 %v32, %v305
  %v578 = vsub.f32 %v33, %v306
  %v579 = vsub.f32 %v34, %v307
  %v580 = vsub.f32 %v35, %v308
  %v581 = vsub.f32 %v36, %v309
  %v582 = vsub.f32 %v37, %v310
  %v583 = vsub.f32 %v38, %v311
  %v584 = vsub.f32 %v39, %v312
  %v585 = vsub.f32 %v40, %v313
  %v586 = vsub.f32 %v41, %v314
  %v587 = vsub.f32 %v42, %v315
  %v588 = vsub.f32 %v43, %v316
  %v589 = vsub.f32 %v44, %v317
  %v590 = vsub.f32 %v45, %v318
  %v591 = vsub.f32 %v46, %v319
  %v592 = vld [vmem:[%s1] sm:$0xff]
  %v593 = vld [vmem:[%s1 + $0x8] sm:$0xff]
  %v595 = vsel %vm47, %v576, 0
  %v598 = vsel %vm47, %v577, 0
  %v601 = vsel %vm47, %v578, 0
  %v604 = vsel %vm47, %v579, 0
  %v607 = vsel %vm47, %v580, 0
  %v610 = vsel %vm47, %v581, 0
  %v613 = vsel %vm47, %v582, 0
  %v616 = vsel %vm47, %v583, 0
  %v619 = vsel %vm47, %v584, 0
  %v622 = vsel %vm47, %v585, 0
  %v625 = vsel %vm47, %v586, 0
  %v628 = vsel %vm47, %v587, 0
  %v631 = vsel %vm47, %v588, 0
  %v634 = vsel %vm47, %v589, 0
  %v637 = vsel %vm47, %v590, 0
  %v640 = vsel %vm47, %v591, 0
  %642 = vmatpush.msra.mxu0 0.0
  %643 = vmatpush.msra.mxu0 0.0
  %644 = vmatpush.msra.mxu0 0.0
  %645 = vmatpush.msra.mxu0 0.0
  %646 = vmatpush.msra.mxu0 0.0
  %647 = vmatpush.msra.mxu0 0.0
  %648 = vmatpush.msra.mxu0 0.0
  %649 = vmatpush.msra.mxu0 0.0
  %650 = vmatpush.msra.mxu0 0.0
  %651 = vmatpush.msra.mxu0 0.0
  %652 = vmatpush.msra.mxu0 0.0
  %653 = vmatpush.msra.mxu0 0.0
  %654 = vmatpush.msra.mxu0 0.0
  %655 = vmatpush.msra.mxu0 0.0
  %656 = vmatpush.msra.mxu0 0.0
  %657 = vmatpush.msra.mxu0 %v593
  %658 = vmatmul.f32.gmra.mxu0 %v595
  %v659 = vpop.f32.mrf.mxu0
  %v660 = vadd.f32 0.0, %v659
  %661 = vmatmul.f32.gmra.mxu0 %v598
  %v662 = vpop.f32.mrf.mxu0
  %v663 = vadd.f32 0.0, %v662
  %664 = vmatmul.f32.gmra.mxu0 %v601
  %v665 = vpop.f32.mrf.mxu0
  %v666 = vadd.f32 0.0, %v665
  %667 = vmatmul.f32.gmra.mxu0 %v604
  %v668 = vpop.f32.mrf.mxu0
  %v669 = vadd.f32 0.0, %v668
  %670 = vmatmul.f32.gmra.mxu0 %v607
  %v671 = vpop.f32.mrf.mxu0
  %v672 = vadd.f32 0.0, %v671
  %673 = vmatmul.f32.gmra.mxu0 %v610
  %v674 = vpop.f32.mrf.mxu0
  %v675 = vadd.f32 0.0, %v674
  %676 = vmatmul.f32.gmra.mxu0 %v613
  %v677 = vpop.f32.mrf.mxu0
  %v678 = vadd.f32 0.0, %v677
  %679 = vmatmul.f32.gmra.mxu0 %v616
  %v680 = vpop.f32.mrf.mxu0
  %v681 = vadd.f32 0.0, %v680
  %682 = vmatmul.f32.gmra.mxu0 %v619
  %v683 = vpop.f32.mrf.mxu0
  %v684 = vadd.f32 0.0, %v683
  %685 = vmatmul.f32.gmra.mxu0 %v622
  %v686 = vpop.f32.mrf.mxu0
  %v687 = vadd.f32 0.0, %v686
  %688 = vmatmul.f32.gmra.mxu0 %v625
  %v689 = vpop.f32.mrf.mxu0
  %v690 = vadd.f32 0.0, %v689
  %691 = vmatmul.f32.gmra.mxu0 %v628
  %v692 = vpop.f32.mrf.mxu0
  %v693 = vadd.f32 0.0, %v692
  %694 = vmatmul.f32.gmra.mxu0 %v631
  %v695 = vpop.f32.mrf.mxu0
  %v696 = vadd.f32 0.0, %v695
  %697 = vmatmul.f32.gmra.mxu0 %v634
  %v698 = vpop.f32.mrf.mxu0
  %v699 = vadd.f32 0.0, %v698
  %700 = vmatmul.f32.gmra.mxu0 %v637
  %v701 = vpop.f32.mrf.mxu0
  %v702 = vadd.f32 0.0, %v701
  %703 = vmatmul.f32.gmra.mxu0 %v640
  %v704 = vpop.f32.mrf.mxu0
  %v705 = vadd.f32 0.0, %v704
  %706 = vdwg.mxu0
  %v708 = vsel %vm47, %v560, 0
  %v711 = vsel %vm47, %v561, 0
  %v714 = vsel %vm47, %v562, 0
  %v717 = vsel %vm47, %v563, 0
  %v720 = vsel %vm47, %v564, 0
  %v723 = vsel %vm47, %v565, 0
  %v726 = vsel %vm47, %v566, 0
  %v729 = vsel %vm47, %v567, 0
  %v732 = vsel %vm47, %v568, 0
  %v735 = vsel %vm47, %v569, 0
  %v738 = vsel %vm47, %v570, 0
  %v741 = vsel %vm47, %v571, 0
  %v744 = vsel %vm47, %v572, 0
  %v747 = vsel %vm47, %v573, 0
  %v750 = vsel %vm47, %v574, 0
  %v753 = vsel %vm47, %v575, 0
  %755 = vmatpush.msra.mxu0 0.0
  %756 = vmatpush.msra.mxu0 0.0
  %757 = vmatpush.msra.mxu0 0.0
  %758 = vmatpush.msra.mxu0 0.0
  %759 = vmatpush.msra.mxu0 0.0
  %760 = vmatpush.msra.mxu0 0.0
  %761 = vmatpush.msra.mxu0 0.0
  %762 = vmatpush.msra.mxu0 0.0
  %763 = vmatpush.msra.mxu0 0.0
  %764 = vmatpush.msra.mxu0 0.0
  %765 = vmatpush.msra.mxu0 0.0
  %766 = vmatpush.msra.mxu0 0.0
  %767 = vmatpush.msra.mxu0 0.0
  %768 = vmatpush.msra.mxu0 0.0
  %769 = vmatpush.msra.mxu0 0.0
  %770 = vmatpush.msra.mxu0 %v592
  %771 = vmatmul.f32.gmra.mxu0 %v708
  %v772 = vpop.f32.mrf.mxu0
  %v773 = vadd.f32 %v660, %v772
  %774 = vmatmul.f32.gmra.mxu0 %v711
  %v775 = vpop.f32.mrf.mxu0
  %v776 = vadd.f32 %v663, %v775
  %777 = vmatmul.f32.gmra.mxu0 %v714
  %v778 = vpop.f32.mrf.mxu0
  %v779 = vadd.f32 %v666, %v778
  %780 = vmatmul.f32.gmra.mxu0 %v717
  %v781 = vpop.f32.mrf.mxu0
  %v782 = vadd.f32 %v669, %v781
  %783 = vmatmul.f32.gmra.mxu0 %v720
  %v784 = vpop.f32.mrf.mxu0
  %v785 = vadd.f32 %v672, %v784
  %786 = vmatmul.f32.gmra.mxu0 %v723
  %v787 = vpop.f32.mrf.mxu0
  %v788 = vadd.f32 %v675, %v787
  %789 = vmatmul.f32.gmra.mxu0 %v726
  %v790 = vpop.f32.mrf.mxu0
  %v791 = vadd.f32 %v678, %v790
  %792 = vmatmul.f32.gmra.mxu0 %v729
  %v793 = vpop.f32.mrf.mxu0
  %v794 = vadd.f32 %v681, %v793
  %795 = vmatmul.f32.gmra.mxu0 %v732
  %v796 = vpop.f32.mrf.mxu0
  %v797 = vadd.f32 %v684, %v796
  %798 = vmatmul.f32.gmra.mxu0 %v735
  %v799 = vpop.f32.mrf.mxu0
  %v800 = vadd.f32 %v687, %v799
  %801 = vmatmul.f32.gmra.mxu0 %v738
  %v802 = vpop.f32.mrf.mxu0
  %v803 = vadd.f32 %v690, %v802
  %804 = vmatmul.f32.gmra.mxu0 %v741
  %v805 = vpop.f32.mrf.mxu0
  %v806 = vadd.f32 %v693, %v805
  %807 = vmatmul.f32.gmra.mxu0 %v744
  %v808 = vpop.f32.mrf.mxu0
  %v809 = vadd.f32 %v696, %v808
  %810 = vmatmul.f32.gmra.mxu0 %v747
  %v811 = vpop.f32.mrf.mxu0
  %v812 = vadd.f32 %v699, %v811
  %813 = vmatmul.f32.gmra.mxu0 %v750
  %v814 = vpop.f32.mrf.mxu0
  %v815 = vadd.f32 %v702, %v814
  %816 = vmatmul.f32.gmra.mxu0 %v753
  %v817 = vpop.f32.mrf.mxu0
  %v818 = vadd.f32 %v705, %v817
  %819 = vdwg.mxu0
  %v820 = vmul.f32 %v773, %v409
  %v821 = vmul.f32 %v776, %v419
  %v822 = vmul.f32 %v779, %v429
  %v823 = vmul.f32 %v782, %v439
  %v824 = vmul.f32 %v785, %v449
  %v825 = vmul.f32 %v788, %v459
  %v826 = vmul.f32 %v791, %v469
  %v827 = vmul.f32 %v794, %v479
  %v828 = vmul.f32 %v797, %v489
  %v829 = vmul.f32 %v800, %v499
  %v830 = vmul.f32 %v803, %v509
  %v831 = vmul.f32 %v806, %v519
  %v832 = vmul.f32 %v809, %v529
  %v833 = vmul.f32 %v812, %v539
  %v834 = vmul.f32 %v815, %v549
  %v835 = vmul.f32 %v818, %v559
  %v836 = vld [vmem:[%s2] sm:$0x1]
  %v838 = vperm.slane %v836, 0
  %v840 = vadd.f32 %v820, %v838
  %v841 = vadd.f32 %v821, %v838
  %v842 = vadd.f32 %v822, %v838
  %v843 = vadd.f32 %v823, %v838
  %v844 = vadd.f32 %v824, %v838
  %v845 = vadd.f32 %v825, %v838
  %v846 = vadd.f32 %v826, %v838
  %v847 = vadd.f32 %v827, %v838
  %v848 = vadd.f32 %v828, %v838
  %v849 = vadd.f32 %v829, %v838
  %v850 = vadd.f32 %v830, %v838
  %v851 = vadd.f32 %v831, %v838
  %v852 = vadd.f32 %v832, %v838
  %v853 = vadd.f32 %v833, %v838
  %v854 = vadd.f32 %v834, %v838
  %v855 = vadd.f32 %v835, %v838
  %856 = vst.msk [vmem:[%s3] sm:$0xff] %vm47, %v840
  %857 = vst.msk [vmem:[%s3 + $0x8] sm:$0xff] %vm47, %v841
  %858 = vst.msk [vmem:[%s3 + $0x10] sm:$0xff] %vm47, %v842
  %859 = vst.msk [vmem:[%s3 + $0x18] sm:$0xff] %vm47, %v843
  %860 = vst.msk [vmem:[%s3 + $0x20] sm:$0xff] %vm47, %v844
  %861 = vst.msk [vmem:[%s3 + $0x28] sm:$0xff] %vm47, %v845
  %862 = vst.msk [vmem:[%s3 + $0x30] sm:$0xff] %vm47, %v846
  %863 = vst.msk [vmem:[%s3 + $0x38] sm:$0xff] %vm47, %v847
  %864 = vst.msk [vmem:[%s3 + $0x40] sm:$0xff] %vm47, %v848
  %865 = vst.msk [vmem:[%s3 + $0x48] sm:$0xff] %vm47, %v849
  %866 = vst.msk [vmem:[%s3 + $0x50] sm:$0xff] %vm47, %v850
  %867 = vst.msk [vmem:[%s3 + $0x58] sm:$0xff] %vm47, %v851
  %868 = vst.msk [vmem:[%s3 + $0x60] sm:$0xff] %vm47, %v852
  %869 = vst.msk [vmem:[%s3 + $0x68] sm:$0xff] %vm47, %v853
  %870 = vst.msk [vmem:[%s3 + $0x70] sm:$0xff] %vm47, %v854
  %871 = vst.msk [vmem:[%s3 + $0x78] sm:$0xff] %vm47, %v855
  // Predicated region
  $region14: #{tpu_custom_call.1} parent=0 // pred_check
    _
  $region15: #{tpu_custom_call.1} parent=0 // pred_check_branch
    %873 = sbr.rel (0) target = $region17
  $region16: #{tpu_custom_call.1} parent=0 // pred_region
    _
  $region17: #{tpu_custom_call.1} parent=0 // pred_fallthru
    _
  // Predicated region
  $region18: #{tpu_custom_call.1} parent=0 // pred_check
    _
  $region19: #{tpu_custom_call.1} parent=0 // pred_check_branch
    %875 = sbr.rel (0) target = $region21
  $region20: #{tpu_custom_call.1} parent=0 // pred_region
    _
  $region21: #{tpu_custom_call.1} parent=0 // pred_fallthru
    _

</llo_original>
